<compile_context>
chip_gen: v7x
topology: tpu7x:2x2x1
jax: 0.10.0
libtpu: 0.0.40
codegen_flags: <defaults>
</compile_context>

<pallas_src>
import jax
import jax.numpy as jnp
from jax.experimental import pallas as pl
from jax.experimental.pallas import tpu as pltpu


def _tree_sum(terms):
    """Balanced pairwise summation: same op count as a serial fold but a
    log-depth dependence chain (packs better into VLIW bundles)."""
    terms = list(terms)
    while len(terms) > 1:
        nxt = []
        for i in range(0, len(terms) - 1, 2):
            nxt.append(terms[i] + terms[i + 1])
        if len(terms) % 2:
            nxt.append(terms[-1])
        terms = nxt
    return terms[0]


def _trainer_kernel(a_ref, s_ref, x0_ref, noise_ref, w_ref, bias_ref, part_ref):
    """One grid step = (batch-group g, lane tile j).

    a_ref, s_ref      : VMEM (R, 1)  f32   per-row sqrt(a_bar), sqrt(1-a_bar)
    x0_ref, noise_ref : VMEM (R, T)         native dtype, cast to f32 in-kernel
    w_ref             : VMEM (R, R)  f32   packed (block-diag) 1x1-conv weight
    bias_ref          : VMEM (R, 1)  f32   packed per-channel bias
    part_ref          : VMEM (R, PW) f32   lane-dense partial |ans - noise| sums
    """
    R, tile = x0_ref.shape
    pw = part_ref.shape[-1]

    a = a_ref[...]                                   # (R, 1)
    s = s_ref[...]                                   # (R, 1)

    x0 = x0_ref[...].astype(jnp.float32)             # (R, tile)
    nse = noise_ref[...].astype(jnp.float32)         # (R, tile)

    # Algorithm 1 (q-sample): x_t = sqrt(a_bar)*x_0 + sqrt(1-a_bar)*noise,
    # applied row-wise (each row is one (batch, channel) pair).
    x_t = a * x0 + s * nse

    # TODO(synk): the real `self.model` is an external UNet backbone passed to
    # __init__; a deterministic 1x1-conv (channel-mix + bias) surrogate is used
    # here and the timestep-embedding path is not implemented.
    if R >= 64:
        # Genuine feature-channel contraction: worth the MXU.
        ans = jnp.dot(w_ref[...], x_t, preferred_element_type=jnp.float32)
        ans = ans + bias_ref[...]
    else:
        # Tiny channel count: broadcast-FMA on the VPU (MXU >95% idle here),
        # tree-summed to shorten the dependence chain.
        wv = w_ref[...]                              # (R, R)
        prods = [wv[:, c:c + 1] * x_t[c:c + 1, :] for c in range(R)]
        ans = _tree_sum(prods) + bias_ref[...]

    # L1 terms for this tile.
    err = jnp.abs(ans - nse)                         # (R, tile)

    # Lane-dense partial sums: fold 128-column chunks (vreg-aligned slices ->
    # pure VPU adds). The remaining (R, 128) -> scalar reduce happens in JAX.
    if pw == tile:
        part_ref[...] = err
    else:
        chunks = [err[:, k * pw:(k + 1) * pw] for k in range(tile // pw)]
        part_ref[...] = _tree_sum(chunks)


def _choose_batch_pack(batch, channels):
    """Largest p dividing `batch` with p*channels <= 8 (fills vreg sublanes)."""
    pack = 1
    for p in range(1, min(batch, 8) + 1):
        if batch % p == 0 and p * channels <= 8:
            pack = p
    return pack


def _choose_lane_tile(hw, n_rows, itemsize, target_bytes=1 << 20):
    """Largest multiple-of-128 divisor of `hw` whose sublane-padded block is
    <= target_bytes; falls back to the full row when hw is not 128-aligned."""
    if hw % 128 != 0:
        return hw
    padded_rows = -(-n_rows // 8) * 8
    max_cols = max(128, (target_bytes // (padded_rows * itemsize)) // 128 * 128)
    tile = 128
    for cand in range(128, hw + 1, 128):
        if hw % cand == 0 and cand <= max_cols:
            tile = cand
    return tile


def gaussian_diffusion_trainer_forward(x_0, t, noise,
                                       sqrt_alphas_bar,
                                       sqrt_one_minus_alphas_bar,
                                       w, bias):
    """Pallas implementation of GaussianDiffusionTrainerV1.forward.

    x_0, noise : (B, C, H, W) NCHW, any float dtype (cast to f32 in-kernel)
    t          : (B,) int32 timesteps in [0, T)
    returns    : scalar f32 L1 loss (mean over all elements)
    """
    B, C, H, W = x_0.shape
    HW = H * W

    # extract(): per-sample coefficients (cheap O(B) gather in plain JAX).
    a = sqrt_alphas_bar[t].astype(jnp.float32)                 # (B,)
    s = sqrt_one_minus_alphas_bar[t].astype(jnp.float32)       # (B,)

    # Sublane packing: fold `pack` batch elements into the sublane axis so the
    # second-minor block dim fills the 8-sublane vreg (zero-copy reshape).
    pack = _choose_batch_pack(B, C)
    R = pack * C                 # rows per packed block
    G = B // pack                # number of packed batch groups

    x0_p = x_0.reshape(G, R, HW)      # free row-major regrouping, no copy/cast
    n_p = noise.reshape(G, R, HW)

    # Per-row q-sample coefficients: row (g, p*C + c) belongs to batch g*pack+p.
    a_rows = jnp.repeat(a, C).reshape(G, R, 1)
    s_rows = jnp.repeat(s, C).reshape(G, R, 1)

    # Packed surrogate weight/bias: block-diagonal so the same 1x1 conv is
    # applied independently to each batch element sharing a block.
    w_p = jnp.kron(jnp.eye(pack, dtype=jnp.float32), w.astype(jnp.float32))  # (R, R)
    b_p = jnp.tile(bias.astype(jnp.float32).reshape(C, 1), (pack, 1))        # (R, 1)

    itemsize = jnp.dtype(x_0.dtype).itemsize
    tile = _choose_lane_tile(HW, R, itemsize)
    nt = HW // tile
    pw = 128 if tile % 128 == 0 else tile

    # VMEM budget: 2 inputs x 2 pipeline buffers x sublane-padded block + f32
    # temporaries/partials; explicit so the choice also fits v7x (64 MiB phys).
    in_block = 8 * tile * itemsize
    vmem_limit = int(min(64 << 20, max(16 << 20, 4 * in_block + 10 * 8 * tile * 4)))

    partials = pl.pallas_call(
        _trainer_kernel,
        out_shape=jax.ShapeDtypeStruct((G, nt, R, pw), jnp.float32),
        grid_spec=pltpu.PrefetchScalarGridSpec(
            num_scalar_prefetch=0,
            grid=(G, nt),
            in_specs=[
                pl.BlockSpec((None, R, 1), lambda g, j: (g, 0, 0)),      # a rows
                pl.BlockSpec((None, R, 1), lambda g, j: (g, 0, 0)),      # s rows
                pl.BlockSpec((None, R, tile), lambda g, j: (g, 0, j)),   # x_0
                pl.BlockSpec((None, R, tile), lambda g, j: (g, 0, j)),   # noise
                pl.BlockSpec((R, R), lambda g, j: (0, 0)),               # weight
                pl.BlockSpec((R, 1), lambda g, j: (0, 0)),               # bias
            ],
            out_specs=pl.BlockSpec((None, None, R, pw),
                                   lambda g, j: (g, j, 0, 0)),
        ),
        compiler_params=pltpu.CompilerParams(
            dimension_semantics=("parallel", "parallel"),
            vmem_limit_bytes=vmem_limit),
    )(a_rows, s_rows, x0_p, n_p, w_p, b_p)

    # Final cross-lane reduce + L1Loss(reduction='mean') normalization in JAX.
    return jnp.sum(partials) / (B * C * HW)


if __name__ == "__main__":
    key = jax.random.PRNGKey(0)
    k_x, k_t, k_noise, k_w, k_b = jax.random.split(key, 5)

    # Small shapes consistent with the module's forward.
    B, C, H, W = 2, 4, 16, 16
    T = 100
    beta_1, beta_T = 1e-4, 0.02

    # __init__ buffers (deterministic, in-script).
    betas = jnp.linspace(beta_1, beta_T, T, dtype=jnp.float32)
    alphas = 1.0 - betas
    alphas_bar = jnp.cumprod(alphas)
    sqrt_alphas_bar = jnp.sqrt(alphas_bar)
    sqrt_one_minus_alphas_bar = jnp.sqrt(1.0 - alphas_bar)

    # Forward-pass random draws (torch.randint / torch.rand_like -> uniform,
    # exactly as written in the reference module), sampled deterministically
    # in the wrapper so the kernel stays verifiable against a JAX reference.
    x_0 = jax.random.normal(k_x, (B, C, H, W), dtype=jnp.float32)
    t = jax.random.randint(k_t, (B,), 0, T, dtype=jnp.int32)
    noise = jax.random.uniform(k_noise, (B, C, H, W), dtype=jnp.float32)

    # Deterministic surrogate model parameters (1x1 conv, C->C).
    w = jnp.eye(C, dtype=jnp.float32) + 0.1 * jax.random.normal(k_w, (C, C), dtype=jnp.float32)
    bias = 0.01 * jax.random.normal(k_b, (C, 1), dtype=jnp.float32)

    loss = gaussian_diffusion_trainer_forward(
        x_0, t, noise, sqrt_alphas_bar, sqrt_one_minus_alphas_bar, w, bias)
    loss = jax.block_until_ready(loss)

    # Pure-JAX reference of the same forward.
    a_ref_v = sqrt_alphas_bar[t][:, None, None, None]
    s_ref_v = sqrt_one_minus_alphas_bar[t][:, None, None, None]
    x_t_ref = a_ref_v * x_0 + s_ref_v * noise
    ans_ref = jnp.einsum("oc,bchw->bohw", w, x_t_ref) + bias.reshape(1, C, 1, 1)
    loss_ref = jnp.mean(jnp.abs(ans_ref - noise))

    assert jnp.allclose(loss, loss_ref, rtol=1e-5, atol=1e-5), (loss, loss_ref)
    print("KERNEL_OK")
</pallas_src>

<mosaic_0001>
module attributes {stable_mosaic.version = 11 : i64} {
  func.func @_trainer_kernel(%arg0: i32, %arg1: i32, %arg2: memref<1x8x1xf32, #tpu.memory_space<vmem>>, %arg3: memref<1x8x1xf32, #tpu.memory_space<vmem>>, %arg4: memref<1x8x256xf32, #tpu.memory_space<vmem>>, %arg5: memref<1x8x256xf32, #tpu.memory_space<vmem>>, %arg6: memref<8x8xf32, #tpu.memory_space<vmem>>, %arg7: memref<8x1xf32, #tpu.memory_space<vmem>>, %arg8: memref<1x1x8x128xf32, #tpu.memory_space<vmem>>) attributes {dimension_semantics = [#tpu.dimension_semantics<parallel>, #tpu.dimension_semantics<parallel>], iteration_bounds = array<i64: 1, 1>, scalar_prefetch = 0 : i64, scratch_operands = 0 : i64, tpu.core_type = #tpu.core_type<tc>, window_params = [{transform_indices = @transform_0, window_bounds = array<i64: 1, 8, 1>}, {transform_indices = @transform_1, window_bounds = array<i64: 1, 8, 1>}, {transform_indices = @transform_2, window_bounds = array<i64: 1, 8, 256>}, {transform_indices = @transform_3, window_bounds = array<i64: 1, 8, 256>}, {pipeline_mode = #tpu.pipeline_mode<synchronous>, transform_indices = @transform_4, window_bounds = array<i64: 8, 8>}, {pipeline_mode = #tpu.pipeline_mode<synchronous>, transform_indices = @transform_5, window_bounds = array<i64: 8, 1>}, {transform_indices = @transform_6, window_bounds = array<i64: 1, 1, 8, 128>}]} {
    %c0 = arith.constant 0 : index
    %c0_0 = arith.constant 0 : index
    %c0_1 = arith.constant 0 : index
    %0 = vector.load %arg2[%c0, %c0_0, %c0_1] : memref<1x8x1xf32, #tpu.memory_space<vmem>>, vector<1x8x1xf32>
    %1 = vector.shape_cast %0 : vector<1x8x1xf32> to vector<8x1xf32>
    %c0_2 = arith.constant 0 : index
    %c0_3 = arith.constant 0 : index
    %c0_4 = arith.constant 0 : index
    %2 = vector.load %arg3[%c0_2, %c0_3, %c0_4] : memref<1x8x1xf32, #tpu.memory_space<vmem>>, vector<1x8x1xf32>
    %3 = vector.shape_cast %2 : vector<1x8x1xf32> to vector<8x1xf32>
    %c0_5 = arith.constant 0 : index
    %c0_6 = arith.constant 0 : index
    %c0_7 = arith.constant 0 : index
    %4 = vector.load %arg4[%c0_5, %c0_6, %c0_7] : memref<1x8x256xf32, #tpu.memory_space<vmem>>, vector<1x8x256xf32>
    %5 = vector.shape_cast %4 : vector<1x8x256xf32> to vector<8x256xf32>
    %c0_8 = arith.constant 0 : index
    %c0_9 = arith.constant 0 : index
    %c0_10 = arith.constant 0 : index
    %6 = vector.load %arg5[%c0_8, %c0_9, %c0_10] : memref<1x8x256xf32, #tpu.memory_space<vmem>>, vector<1x8x256xf32>
    %7 = vector.shape_cast %6 : vector<1x8x256xf32> to vector<8x256xf32>
    %8 = vector.broadcast %1 : vector<8x1xf32> to vector<8x256xf32>
    %9 = arith.mulf %8, %5 : vector<8x256xf32>
    %10 = vector.broadcast %3 : vector<8x1xf32> to vector<8x256xf32>
    %11 = arith.mulf %10, %7 : vector<8x256xf32>
    %12 = arith.addf %9, %11 : vector<8x256xf32>
    %c0_11 = arith.constant 0 : index
    %c0_12 = arith.constant 0 : index
    %13 = vector.load %arg6[%c0_11, %c0_12] : memref<8x8xf32, #tpu.memory_space<vmem>>, vector<8x8xf32>
    %14 = vector.extract_strided_slice %13 {offsets = [0, 0], sizes = [8, 1], strides = [1, 1]} : vector<8x8xf32> to vector<8x1xf32>
    %15 = vector.extract_strided_slice %12 {offsets = [0, 0], sizes = [1, 256], strides = [1, 1]} : vector<8x256xf32> to vector<1x256xf32>
    %16 = vector.broadcast %14 : vector<8x1xf32> to vector<8x256xf32>
    %17 = vector.broadcast %15 : vector<1x256xf32> to vector<8x256xf32>
    %18 = arith.mulf %16, %17 : vector<8x256xf32>
    %19 = vector.extract_strided_slice %13 {offsets = [0, 1], sizes = [8, 1], strides = [1, 1]} : vector<8x8xf32> to vector<8x1xf32>
    %20 = vector.extract_strided_slice %12 {offsets = [1, 0], sizes = [1, 256], strides = [1, 1]} : vector<8x256xf32> to vector<1x256xf32>
    %21 = vector.broadcast %19 : vector<8x1xf32> to vector<8x256xf32>
    %22 = vector.broadcast %20 : vector<1x256xf32> to vector<8x256xf32>
    %23 = arith.mulf %21, %22 : vector<8x256xf32>
    %24 = vector.extract_strided_slice %13 {offsets = [0, 2], sizes = [8, 1], strides = [1, 1]} : vector<8x8xf32> to vector<8x1xf32>
    %25 = vector.extract_strided_slice %12 {offsets = [2, 0], sizes = [1, 256], strides = [1, 1]} : vector<8x256xf32> to vector<1x256xf32>
    %26 = vector.broadcast %24 : vector<8x1xf32> to vector<8x256xf32>
    %27 = vector.broadcast %25 : vector<1x256xf32> to vector<8x256xf32>
    %28 = arith.mulf %26, %27 : vector<8x256xf32>
    %29 = vector.extract_strided_slice %13 {offsets = [0, 3], sizes = [8, 1], strides = [1, 1]} : vector<8x8xf32> to vector<8x1xf32>
    %30 = vector.extract_strided_slice %12 {offsets = [3, 0], sizes = [1, 256], strides = [1, 1]} : vector<8x256xf32> to vector<1x256xf32>
    %31 = vector.broadcast %29 : vector<8x1xf32> to vector<8x256xf32>
    %32 = vector.broadcast %30 : vector<1x256xf32> to vector<8x256xf32>
    %33 = arith.mulf %31, %32 : vector<8x256xf32>
    %34 = vector.extract_strided_slice %13 {offsets = [0, 4], sizes = [8, 1], strides = [1, 1]} : vector<8x8xf32> to vector<8x1xf32>
    %35 = vector.extract_strided_slice %12 {offsets = [4, 0], sizes = [1, 256], strides = [1, 1]} : vector<8x256xf32> to vector<1x256xf32>
    %36 = vector.broadcast %34 : vector<8x1xf32> to vector<8x256xf32>
    %37 = vector.broadcast %35 : vector<1x256xf32> to vector<8x256xf32>
    %38 = arith.mulf %36, %37 : vector<8x256xf32>
    %39 = vector.extract_strided_slice %13 {offsets = [0, 5], sizes = [8, 1], strides = [1, 1]} : vector<8x8xf32> to vector<8x1xf32>
    %40 = vector.extract_strided_slice %12 {offsets = [5, 0], sizes = [1, 256], strides = [1, 1]} : vector<8x256xf32> to vector<1x256xf32>
    %41 = vector.broadcast %39 : vector<8x1xf32> to vector<8x256xf32>
    %42 = vector.broadcast %40 : vector<1x256xf32> to vector<8x256xf32>
    %43 = arith.mulf %41, %42 : vector<8x256xf32>
    %44 = vector.extract_strided_slice %13 {offsets = [0, 6], sizes = [8, 1], strides = [1, 1]} : vector<8x8xf32> to vector<8x1xf32>
    %45 = vector.extract_strided_slice %12 {offsets = [6, 0], sizes = [1, 256], strides = [1, 1]} : vector<8x256xf32> to vector<1x256xf32>
    %46 = vector.broadcast %44 : vector<8x1xf32> to vector<8x256xf32>
    %47 = vector.broadcast %45 : vector<1x256xf32> to vector<8x256xf32>
    %48 = arith.mulf %46, %47 : vector<8x256xf32>
    %49 = vector.extract_strided_slice %13 {offsets = [0, 7], sizes = [8, 1], strides = [1, 1]} : vector<8x8xf32> to vector<8x1xf32>
    %50 = vector.extract_strided_slice %12 {offsets = [7, 0], sizes = [1, 256], strides = [1, 1]} : vector<8x256xf32> to vector<1x256xf32>
    %51 = vector.broadcast %49 : vector<8x1xf32> to vector<8x256xf32>
    %52 = vector.broadcast %50 : vector<1x256xf32> to vector<8x256xf32>
    %53 = arith.mulf %51, %52 : vector<8x256xf32>
    %54 = arith.addf %18, %23 : vector<8x256xf32>
    %55 = arith.addf %28, %33 : vector<8x256xf32>
    %56 = arith.addf %38, %43 : vector<8x256xf32>
    %57 = arith.addf %48, %53 : vector<8x256xf32>
    %58 = arith.addf %54, %55 : vector<8x256xf32>
    %59 = arith.addf %56, %57 : vector<8x256xf32>
    %60 = arith.addf %58, %59 : vector<8x256xf32>
    %c0_13 = arith.constant 0 : index
    %c0_14 = arith.constant 0 : index
    %61 = vector.load %arg7[%c0_13, %c0_14] : memref<8x1xf32, #tpu.memory_space<vmem>>, vector<8x1xf32>
    %62 = vector.broadcast %61 : vector<8x1xf32> to vector<8x256xf32>
    %63 = arith.addf %60, %62 : vector<8x256xf32>
    %64 = arith.subf %63, %7 : vector<8x256xf32>
    %65 = math.absf %64 : vector<8x256xf32>
    %66 = vector.extract_strided_slice %65 {offsets = [0, 0], sizes = [8, 128], strides = [1, 1]} : vector<8x256xf32> to vector<8x128xf32>
    %67 = vector.extract_strided_slice %65 {offsets = [0, 128], sizes = [8, 128], strides = [1, 1]} : vector<8x256xf32> to vector<8x128xf32>
    %68 = arith.addf %66, %67 : vector<8x128xf32>
    %c0_15 = arith.constant 0 : index
    %c0_16 = arith.constant 0 : index
    %c0_17 = arith.constant 0 : index
    %c0_18 = arith.constant 0 : index
    %69 = vector.load %arg8[%c0_15, %c0_16, %c0_17, %c0_18] : memref<1x1x8x128xf32, #tpu.memory_space<vmem>>, vector<1x1x8x128xf32>
    %70 = vector.shape_cast %69 : vector<1x1x8x128xf32> to vector<8x128xf32>
    %71 = vector.shape_cast %68 : vector<8x128xf32> to vector<1x1x8x128xf32>
    tpu.vector_store %arg8[%c0_15, %c0_16, %c0_17, %c0_18], %71 {strides = array<i32>} : memref<1x1x8x128xf32, #tpu.memory_space<vmem>>, vector<1x1x8x128xf32>,
    return
  }
  func.func @transform_0(%arg0: i32, %arg1: i32) -> (i32, i32, i32) {
    %c0_i32 = arith.constant 0 : i32
    %c0_i32_0 = arith.constant 0 : i32
    %c0_i32_1 = arith.constant 0 : i32
    return %arg0, %c0_i32, %c0_i32_0 : i32, i32, i32
  }
  func.func @transform_1(%arg0: i32, %arg1: i32) -> (i32, i32, i32) {
    %c0_i32 = arith.constant 0 : i32
    %c0_i32_0 = arith.constant 0 : i32
    %c0_i32_1 = arith.constant 0 : i32
    return %arg0, %c0_i32, %c0_i32_0 : i32, i32, i32
  }
  func.func @transform_2(%arg0: i32, %arg1: i32) -> (i32, i32, i32) {
    %c0_i32 = arith.constant 0 : i32
    %c0_i32_0 = arith.constant 0 : i32
    return %arg0, %c0_i32, %arg1 : i32, i32, i32
  }
  func.func @transform_3(%arg0: i32, %arg1: i32) -> (i32, i32, i32) {
    %c0_i32 = arith.constant 0 : i32
    %c0_i32_0 = arith.constant 0 : i32
    return %arg0, %c0_i32, %arg1 : i32, i32, i32
  }
  func.func @transform_4(%arg0: i32, %arg1: i32) -> (i32, i32) {
    %c0_i32 = arith.constant 0 : i32
    %c0_i32_0 = arith.constant 0 : i32
    %c0_i32_1 = arith.constant 0 : i32
    return %c0_i32, %c0_i32_0 : i32, i32
  }
  func.func @transform_5(%arg0: i32, %arg1: i32) -> (i32, i32) {
    %c0_i32 = arith.constant 0 : i32
    %c0_i32_0 = arith.constant 0 : i32
    %c0_i32_1 = arith.constant 0 : i32
    return %c0_i32, %c0_i32_0 : i32, i32
  }
  func.func @transform_6(%arg0: i32, %arg1: i32) -> (i32, i32, i32, i32) {
    %c0_i32 = arith.constant 0 : i32
    %c0_i32_0 = arith.constant 0 : i32
    %c0_i32_1 = arith.constant 0 : i32
    return %arg0, %arg1, %c0_i32, %c0_i32_0 : i32, i32, i32, i32
  }
}

</mosaic_0001>

<llo_original>
// kernel: tpu_custom_call.1
$region0: #{tpu_custom_call.1}
  #allocation0 [shape = 'u32[]', space=smem, size = 0x4, offset = 0x4, fixed_abs, tag = 'smem constant byte address 0x4 - core index']
  #allocation1 [shape = 'u32[144,128]{1,0:T(1,128)}', space=vmem, size = 0x12000, scoped, tag = 'internal scratch']
  %s0 = inlined_call_operand.vmem [shape: f32[1,8,1], index: 0, kind: input, shape index: {}]
  %s1 = inlined_call_operand.vmem [shape: f32[1,8,1], index: 1, kind: input, shape index: {}]
  %s2 = inlined_call_operand.vmem [shape: f32[1,8,256], index: 2, kind: input, shape index: {}]
  %s3 = inlined_call_operand.vmem [shape: f32[1,8,256], index: 3, kind: input, shape index: {}]
  %s4 = inlined_call_operand.vmem [shape: f32[8,8], index: 4, kind: input, shape index: {}]
  %s5 = inlined_call_operand.vmem [shape: f32[8,1], index: 5, kind: input, shape index: {}]
  %s6 = inlined_call_operand.hbm [shape: f32[1,1,8,128], index: 6, kind: output, shape index: {}]
  %s7 = sld [smem:[#allocation0]]
  $region34: #{tpu_custom_call.1} parent=0
    _
  %s9 = ssub.s32 1, %s7
  %s10 = scalar_select 0, %s9, %s7
  $region1: #{tpu_custom_call.1} parent=0
    #allocation2 [shape = 'u8[4096]{0}', space=vmem, size = 0x1000, scoped, tag = 'output window, operand 0, single buffered']
    #allocation3 [shape = 's32[1]{0}', space=sflag, size = 0x4, scoped, tag = 'scoped memory for tpu_custom_call.1']
    %11 = vsyncpa [#allocation3], 0
    // Predicated region
    $region2: #{tpu_custom_call.1} parent=1 // pred_check
      _
    $region3: #{tpu_custom_call.1} parent=1 // pred_check_branch
      %13 = sbr.rel (0) target = $region5
    $region4: #{tpu_custom_call.1} parent=1 // pred_region
      _
    $region5: #{tpu_custom_call.1} parent=1 // pred_fallthru
      _
    // Predicated region
    $region6: #{tpu_custom_call.1} parent=1 // pred_check
      _
    $region7: #{tpu_custom_call.1} parent=1 // pred_check_branch
      %15 = sbr.rel (0) target = $region9
    $region8: #{tpu_custom_call.1} parent=1 // pred_region
      _
    $region9: #{tpu_custom_call.1} parent=1 // pred_fallthru
      _
    // Predicated region
    $region10: #{tpu_custom_call.1} parent=1 // pred_check
      _
    $region11: #{tpu_custom_call.1} parent=1 // pred_check_branch
      %17 = sbr.rel (0) target = $region13
    $region12: #{tpu_custom_call.1} parent=1 // pred_region
      _
    $region13: #{tpu_custom_call.1} parent=1 // pred_fallthru
      _
    // Predicated region
    $region14: #{tpu_custom_call.1} parent=1 // pred_check
      _
    $region15: #{tpu_custom_call.1} parent=1 // pred_check_branch
      %19 = sbr.rel (0) target = $region17
    $region16: #{tpu_custom_call.1} parent=1 // pred_region
      _
    $region17: #{tpu_custom_call.1} parent=1 // pred_fallthru
      _
    // Predicated region
    $region18: #{tpu_custom_call.1} parent=1 // pred_check
      _
    $region19: #{tpu_custom_call.1} parent=1 // pred_check_branch
      %21 = sbr.rel (0) target = $region21
    $region20: #{tpu_custom_call.1} parent=1 // pred_region
      _
    $region21: #{tpu_custom_call.1} parent=1 // pred_fallthru
      _
    // Predicated region
    $region22: #{tpu_custom_call.1} parent=1 // pred_check
      _
    $region23: #{tpu_custom_call.1} parent=1 // pred_check_branch
      %23 = sbr.rel (0) target = $region25
    $region24: #{tpu_custom_call.1} parent=1 // pred_region
      _
    $region25: #{tpu_custom_call.1} parent=1 // pred_fallthru
      _
    %v24 = vld [vmem:[%s0] sm:$0xff]
    %v25 = vld [vmem:[%s1] sm:$0xff]
    %v26 = vld [vmem:[%s2] sm:$0xff]
    %v27 = vld [vmem:[%s2 + $0x8] sm:$0xff]
    %v28 = vld [vmem:[%s3] sm:$0xff]
    %v29 = vld [vmem:[%s3 + $0x8] sm:$0xff]
    %31 = vset.pattern.permute.xlu0 0
    %32 = vperm.xlu0 %31, %v24
    %v33 = vpop.permute.xlu0 %32
    %v35 = vmul.f32 %v33, %v26
    %v36 = vmul.f32 %v33, %v27
    %38 = vset.pattern.permute.xlu0 0
    %39 = vperm.xlu0 %38, %v25
    %v40 = vpop.permute.xlu0 %39
    %v42 = vmul.f32 %v40, %v28
    %v43 = vmul.f32 %v40, %v29
    %v44 = vadd.f32 %v35, %v42
    %v45 = vadd.f32 %v36, %v43
    %v46 = vld [vmem:[%s4] sm:$0xff]
    %48 = vset.pattern.permute.xlu0 0
    %49 = vperm.xlu0 %48, %v46
    %v50 = vpop.permute.xlu0 %49
    %v52 = vlaneseq
    %v53 = vshrl.u32 %v52, 7
    %v54 = vsub.s32 0, %v53
    %v55 = vrot.slane %v44, %v54
    %v56 = vlaneseq
    %v57 = vshrl.u32 %v56, 7
    %v58 = vsub.s32 0, %v57
    %v59 = vrot.slane %v45, %v58
    %v60 = vmul.f32 %v50, %v55
    %v61 = vmul.f32 %v50, %v59
    %62 = vset.pattern.permute.xlu0 1
    %63 = vperm.xlu0 %62, %v46
    %v64 = vpop.permute.xlu0 %63
    %v66 = vlaneseq
    %v67 = vshrl.u32 %v66, 7
    %v68 = vsub.s32 1, %v67
    %v69 = vrot.slane %v44, %v68
    %v70 = vlaneseq
    %v71 = vshrl.u32 %v70, 7
    %v72 = vsub.s32 1, %v71
    %v73 = vrot.slane %v45, %v72
    %v74 = vmul.f32 %v64, %v69
    %v75 = vmul.f32 %v64, %v73
    %76 = vset.pattern.permute.xlu0 2
    %77 = vperm.xlu0 %76, %v46
    %v78 = vpop.permute.xlu0 %77
    %v80 = vlaneseq
    %v81 = vshrl.u32 %v80, 7
    %v82 = vsub.s32 2, %v81
    %v83 = vrot.slane %v44, %v82
    %v84 = vlaneseq
    %v85 = vshrl.u32 %v84, 7
    %v86 = vsub.s32 2, %v85
    %v87 = vrot.slane %v45, %v86
    %v88 = vmul.f32 %v78, %v83
    %v89 = vmul.f32 %v78, %v87
    %90 = vset.pattern.permute.xlu0 3
    %91 = vperm.xlu0 %90, %v46
    %v92 = vpop.permute.xlu0 %91
    %v94 = vlaneseq
    %v95 = vshrl.u32 %v94, 7
    %v96 = vsub.s32 3, %v95
    %v97 = vrot.slane %v44, %v96
    %v98 = vlaneseq
    %v99 = vshrl.u32 %v98, 7
    %v100 = vsub.s32 3, %v99
    %v101 = vrot.slane %v45, %v100
    %v102 = vmul.f32 %v92, %v97
    %v103 = vmul.f32 %v92, %v101
    %104 = vset.pattern.permute.xlu0 4
    %105 = vperm.xlu0 %104, %v46
    %v106 = vpop.permute.xlu0 %105
    %v108 = vlaneseq
    %v109 = vshrl.u32 %v108, 7
    %v110 = vsub.s32 4, %v109
    %v111 = vrot.slane %v44, %v110
    %v112 = vlaneseq
    %v113 = vshrl.u32 %v112, 7
    %v114 = vsub.s32 4, %v113
    %v115 = vrot.slane %v45, %v114
    %v116 = vmul.f32 %v106, %v111
    %v117 = vmul.f32 %v106, %v115
    %118 = vset.pattern.permute.xlu0 5
    %119 = vperm.xlu0 %118, %v46
    %v120 = vpop.permute.xlu0 %119
    %v122 = vlaneseq
    %v123 = vshrl.u32 %v122, 7
    %v124 = vsub.s32 5, %v123
    %v125 = vrot.slane %v44, %v124
    %v126 = vlaneseq
    %v127 = vshrl.u32 %v126, 7
    %v128 = vsub.s32 5, %v127
    %v129 = vrot.slane %v45, %v128
    %v130 = vmul.f32 %v120, %v125
    %v131 = vmul.f32 %v120, %v129
    %132 = vset.pattern.permute.xlu0 6
    %133 = vperm.xlu0 %132, %v46
    %v134 = vpop.permute.xlu0 %133
    %v136 = vlaneseq
    %v137 = vshrl.u32 %v136, 7
    %v138 = vsub.s32 6, %v137
    %v139 = vrot.slane %v44, %v138
    %v140 = vlaneseq
    %v141 = vshrl.u32 %v140, 7
    %v142 = vsub.s32 6, %v141
    %v143 = vrot.slane %v45, %v142
    %v144 = vmul.f32 %v134, %v139
    %v145 = vmul.f32 %v134, %v143
    %146 = vset.pattern.permute.xlu0 7
    %147 = vperm.xlu0 %146, %v46
    %v148 = vpop.permute.xlu0 %147
    %v150 = vlaneseq
    %v151 = vshrl.u32 %v150, 7
    %v152 = vsub.s32 7, %v151
    %v153 = vrot.slane %v44, %v152
    %v154 = vlaneseq
    %v155 = vshrl.u32 %v154, 7
    %v156 = vsub.s32 7, %v155
    %v157 = vrot.slane %v45, %v156
    %v158 = vmul.f32 %v148, %v153
    %v159 = vmul.f32 %v148, %v157
    %v160 = vadd.f32 %v60, %v74
    %v161 = vadd.f32 %v61, %v75
    %v162 = vadd.f32 %v88, %v102
    %v163 = vadd.f32 %v89, %v103
    %v164 = vadd.f32 %v116, %v130
    %v165 = vadd.f32 %v117, %v131
    %v166 = vadd.f32 %v144, %v158
    %v167 = vadd.f32 %v145, %v159
    %v168 = vadd.f32 %v160, %v162
    %v169 = vadd.f32 %v161, %v163
    %v170 = vadd.f32 %v164, %v166
    %v171 = vadd.f32 %v165, %v167
    %v172 = vadd.f32 %v168, %v170
    %v173 = vadd.f32 %v169, %v171
    %v174 = vld [vmem:[%s5] sm:$0xff]
    %176 = vset.pattern.permute.xlu0 0
    %177 = vperm.xlu0 %176, %v174
    %v178 = vpop.permute.xlu0 %177
    %v180 = vadd.f32 %v172, %v178
    %v181 = vadd.f32 %v173, %v178
    %v182 = vsub.f32 %v180, %v28
    %v183 = vsub.f32 %v181, %v29
    %v184 = vand.u32 2147483647, %v182
    %v185 = vand.u32 2147483647, %v183
    %v186 = vadd.f32 %v184, %v185
    %187 = vst [vmem:[#allocation2] sm:$0xff] %v186
    // Predicated region
    $region26: #{tpu_custom_call.1} parent=1 // pred_check
      _
    $region27: #{tpu_custom_call.1} parent=1 // pred_check_branch
      %189 = sbr.rel (0) target = $region29
    $region28: #{tpu_custom_call.1} parent=1 // pred_region
      %s191 = ssub.s32 128, 128
      %192 = vsyncadd [#allocation3], %s191
      %s194 = sshll.u32 [#allocation2], 4
      %s195 = int_to_ptr.vmem [resolvable:$true] %s194
      %197 = dma.vmem_to_hbm [thread:$0]  %s195, 128, %s6, [#allocation3]
    $region29: #{tpu_custom_call.1} parent=1 // pred_fallthru
      _
    // Predicated region
    $region30: #{tpu_custom_call.1} parent=1 // pred_check
      _
    $region31: #{tpu_custom_call.1} parent=1 // pred_check_branch
      %199 = sbr.rel (0) target = $region33
    $region32: #{tpu_custom_call.1} parent=1 // pred_region
      %200 = dma.done [#allocation3], 128
    $region33: #{tpu_custom_call.1} parent=1 // pred_fallthru
      _
    %201 = vsyncpa [#allocation3], 1

</llo_original>
